<compile_context>
chip_gen: v6e
topology: v6e:2x2x1
jax: 0.10.0
libtpu: 0.0.40
codegen_flags: <defaults>
</compile_context>

<pallas_src>
import functools
import math

import jax
import jax.numpy as jnp
from jax.experimental import pallas as pl
from jax.experimental.pallas import tpu as pltpu


def _round_up(x, m):
    return (x + m - 1) // m * m


def _tm_cap(K, E, in_itemsize, out_itemsize, max_tile_rows, vmem_budget_bytes):
    """Largest row tile whose double-buffered in+out tiles fit the VMEM budget."""
    per_row = 2 * (K * in_itemsize + E * out_itemsize)  # double-buffered x + out
    return max(8, min(max_tile_rows, vmem_budget_bytes // per_row))


def _choose_tm(M, sublane, cap, min_steps=2):
    """Pick a row tile: multiple of `sublane`, <= cap, >= `min_steps` grid steps
    when M allows (feeds both v7x TensorCores), and preferably an exact divisor
    of M so no row padding (and no post-kernel slice copy) is needed."""
    cap = max(sublane, cap // sublane * sublane)
    if M <= sublane * min_steps:
        return min(_round_up(max(M, 1), sublane), cap)
    hi = max(sublane, min(cap, (M // min_steps) // sublane * sublane))
    if M % sublane == 0:
        tm = hi
        while tm >= sublane:           # small trace-time search (<= cap/sublane)
            if M % tm == 0:
                return tm
            tm -= sublane
    return hi                          # fallback: pad rows, slice after the call


def _patch_embed_kernel(x_ref, w_ref, b_ref, *rest, embed_dim, eps, use_norm):
    """One row tile: (tm, K) @ (K, E) + bias [+ fused LayerNorm]."""
    if use_norm:
        g_ref, beta_ref, o_ref = rest
    else:
        (o_ref,) = rest

    acc = jnp.dot(x_ref[...], w_ref[...], preferred_element_type=jnp.float32)
    acc = acc + b_ref[...]                                   # (1, E) f32 broadcast

    if use_norm:
        inv_e = 1.0 / float(embed_dim)
        mean = jnp.sum(acc, axis=-1, keepdims=True) * inv_e
        mean_sq = jnp.sum(acc * acc, axis=-1, keepdims=True) * inv_e
        var = mean_sq - mean * mean
        inv = jax.lax.rsqrt(var + eps)                        # EUP, free-ish slot
        acc = (acc - mean) * inv
        acc = acc * g_ref[...] + beta_ref[...]

    o_ref[...] = acc.astype(o_ref.dtype)


def patch_embed_forward(x, params, *, patch_size, eps=1e-5,
                        compute_dtype=jnp.bfloat16, out_dtype=None,
                        max_tile_rows=2048, vmem_budget_bytes=12 << 20):
    """PatchEmbed forward.

    x:       [B, C, Z, H, W]   (PyTorch NCDHW layout)
    params:  {"proj_w": [E, C, p0, p1, p2], "proj_b": [E],
              optional "norm_w": [E], "norm_b": [E]}
    returns: [B, Np, E] with Np = (Z/p0)*(H/p1)*(W/p2), dtype out_dtype (default
             x.dtype). compute_dtype defaults to bf16 operands with f32 accumulate.
    """
    p0, p1, p2 = patch_size
    B, C, Z, H, W = x.shape
    assert Z % p0 == 0 and H % p1 == 0 and W % p2 == 0, (x.shape, patch_size)
    Zo, Ho, Wo = Z // p0, H // p1, W // p2
    Np = Zo * Ho * Wo

    w = params["proj_w"]
    b = params["proj_b"]
    E = w.shape[0]
    K = C * p0 * p1 * p2
    use_norm = "norm_w" in params

    if compute_dtype is None:
        compute_dtype = x.dtype
    if out_dtype is None:
        out_dtype = x.dtype
    in_itemsize = jnp.dtype(compute_dtype).itemsize
    out_itemsize = jnp.dtype(out_dtype).itemsize
    sublane = max(8, 32 // in_itemsize)          # 8 for f32, 16 for bf16 packing

    M = B * Np
    tm = _choose_tm(M, sublane,
                    _tm_cap(K, E, in_itemsize, out_itemsize,
                            max_tile_rows, vmem_budget_bytes))
    Mp = _round_up(M, tm)

    # ---- glue: cast FIRST (halves the im2col pass's HBM bytes), then patchify.
    # stride == kernel, so this is a pure reshape/transpose; allow_input_fusion
    # below lets XLA fold this producer into the pallas_call input DMA.
    xc = x.astype(compute_dtype)
    xp = xc.reshape(B, C, Zo, p0, Ho, p1, Wo, p2)
    xp = xp.transpose(0, 2, 4, 6, 1, 3, 5, 7)    # [B, Zo, Ho, Wo, C, p0, p1, p2]
    xp = xp.reshape(M, K)
    if Mp > M:
        xp = jnp.pad(xp, ((0, Mp - M), (0, 0)))

    # ---- glue: fold the conv weight into one (K, E) matmul operand.
    wm = w.reshape(E, K).T.astype(compute_dtype)         # contraction (c, kz, kh, kw)
    bp = b.astype(jnp.float32).reshape(1, E)

    inputs = [xp, wm, bp]
    in_specs = [
        pl.BlockSpec((tm, K), lambda i: (i, 0)),
        pl.BlockSpec((K, E), lambda i: (0, 0)),          # constant block (fetched once)
        pl.BlockSpec((1, E), lambda i: (0, 0)),
    ]
    if use_norm:
        gp = params["norm_w"].astype(jnp.float32).reshape(1, E)
        betap = params["norm_b"].astype(jnp.float32).reshape(1, E)
        inputs += [gp, betap]
        in_specs += [
            pl.BlockSpec((1, E), lambda i: (0, 0)),
            pl.BlockSpec((1, E), lambda i: (0, 0)),
        ]

    kernel = functools.partial(_patch_embed_kernel, embed_dim=E, eps=eps,
                               use_norm=use_norm)

    cost = pl.CostEstimate(
        flops=2 * Mp * K * E,
        transcendentals=Mp if use_norm else 0,
        bytes_accessed=(Mp * K * in_itemsize + K * E * in_itemsize
                        + Mp * E * out_itemsize))

    out = pl.pallas_call(
        kernel,
        out_shape=jax.ShapeDtypeStruct((Mp, E), out_dtype),
        grid=(Mp // tm,),
        in_specs=in_specs,
        out_specs=pl.BlockSpec((tm, E), lambda i: (i, 0)),
        compiler_params=pltpu.CompilerParams(
            dimension_semantics=("parallel",),
            allow_input_fusion=[True] + [False] * (len(inputs) - 1)),
        cost_estimate=cost,
    )(*inputs)

    if Mp > M:                       # fallback only when no row tile divides M
        out = out[:M]
    return out.reshape(B, Np, E)     # trivial (bitcast) reshape when Mp == M


def init_patch_embed_params(key, in_chans, embed_dim, patch_size,
                            with_norm=False, dtype=jnp.float32):
    p0, p1, p2 = patch_size
    kw, kb, kg, kbeta = jax.random.split(key, 4)
    fan_in = in_chans * p0 * p1 * p2
    params = {
        "proj_w": jax.random.normal(kw, (embed_dim, in_chans, p0, p1, p2), dtype)
                  * (1.0 / math.sqrt(fan_in)),
        "proj_b": jax.random.normal(kb, (embed_dim,), dtype) * 0.02,
    }
    if with_norm:
        params["norm_w"] = 1.0 + 0.1 * jax.random.normal(kg, (embed_dim,), dtype)
        params["norm_b"] = 0.05 * jax.random.normal(kbeta, (embed_dim,), dtype)
    return params


def _reference_forward(x, params, *, patch_size, eps=1e-5):
    """Plain-JAX reference (lax conv) for validation."""
    w = params["proj_w"]
    b = params["proj_b"]
    E = w.shape[0]
    out = jax.lax.conv_general_dilated(
        x, w, window_strides=patch_size, padding="VALID",
        dimension_numbers=("NCDHW", "OIDHW", "NCDHW"))
    out = out + b.reshape(1, E, 1, 1, 1)
    B = x.shape[0]
    out = out.reshape(B, E, -1).transpose(0, 2, 1)            # [B, Np, E]
    if "norm_w" in params:
        mean = out.mean(-1, keepdims=True)
        var = ((out - mean) ** 2).mean(-1, keepdims=True)
        out = (out - mean) / jnp.sqrt(var + eps)
        out = out * params["norm_w"] + params["norm_b"]
    return out


if __name__ == "__main__":
    key = jax.random.PRNGKey(0)
    k_x, k_p = jax.random.split(key)

    B, in_chans, embed_dim = 2, 3, 96
    img_size = (16, 16, 16)
    patch_size = (4, 4, 4)

    x = jax.random.normal(k_x, (B, in_chans) + img_size, jnp.float32)
    Np = ((img_size[0] // patch_size[0])
          * (img_size[1] // patch_size[1])
          * (img_size[2] // patch_size[2]))

    # --- no norm, f32 operand path: tight check against the lax.conv reference
    params = init_patch_embed_params(k_p, in_chans, embed_dim, patch_size,
                                     with_norm=False)
    ref = jax.block_until_ready(
        _reference_forward(x, params, patch_size=patch_size))

    out_f32 = jax.block_until_ready(
        patch_embed_forward(x, params, patch_size=patch_size,
                            compute_dtype=jnp.float32))
    assert out_f32.shape == (B, Np, embed_dim), out_f32.shape
    assert jnp.allclose(out_f32, ref, rtol=1e-4, atol=1e-4), (
        float(jnp.max(jnp.abs(out_f32 - ref))))

    # --- default path (bf16 operands, f32 accumulate), jitted so the patchify
    #     producer can fuse into the pallas_call input.
    fwd = jax.jit(functools.partial(patch_embed_forward, patch_size=patch_size))
    out_bf = jax.block_until_ready(fwd(x, params))
    assert out_bf.shape == (B, Np, embed_dim), out_bf.shape
    assert out_bf.dtype == x.dtype, out_bf.dtype
    assert jnp.allclose(out_bf, ref, rtol=1e-1, atol=1e-1), (
        float(jnp.max(jnp.abs(out_bf - ref))))

    # --- with fused LayerNorm, f32 operand path: tight check
    params_n = init_patch_embed_params(k_p, in_chans, embed_dim, patch_size,
                                       with_norm=True)
    ref_n = jax.block_until_ready(
        _reference_forward(x, params_n, patch_size=patch_size))
    out_n = jax.block_until_ready(
        patch_embed_forward(x, params_n, patch_size=patch_size,
                            compute_dtype=jnp.float32))
    assert jnp.allclose(out_n, ref_n, rtol=1e-3, atol=1e-3), (
        float(jnp.max(jnp.abs(out_n - ref_n))))

    # --- fused LayerNorm, default bf16 operands + bf16 output (downstream bf16)
    out_nb = jax.block_until_ready(
        patch_embed_forward(x, params_n, patch_size=patch_size,
                            out_dtype=jnp.bfloat16))
    assert out_nb.dtype == jnp.bfloat16, out_nb.dtype
    assert jnp.allclose(out_nb.astype(jnp.float32), ref_n,
                        rtol=1.5e-1, atol=1.5e-1), (
        float(jnp.max(jnp.abs(out_nb.astype(jnp.float32) - ref_n))))

    print("KERNEL_OK")
</pallas_src>

<mosaic_0001>
module attributes {stable_mosaic.version = 11 : i64} {
  func.func @_patch_embed_kernel(%arg0: i32, %arg1: memref<64x192xf32, #tpu.memory_space<vmem>>, %arg2: memref<192x96xf32, #tpu.memory_space<vmem>>, %arg3: memref<1x96xf32, #tpu.memory_space<vmem>>, %arg4: memref<64x96xf32, #tpu.memory_space<vmem>>) attributes {dimension_semantics = [#tpu.dimension_semantics<parallel>], iteration_bounds = array<i64: 2>, scalar_prefetch = 0 : i64, scratch_operands = 0 : i64, tpu.core_type = #tpu.core_type<tc>, window_params = [{transform_indices = @transform_0, window_bounds = array<i64: 64, 192>}, {pipeline_mode = #tpu.pipeline_mode<synchronous>, transform_indices = @transform_1, window_bounds = array<i64: 192, 96>}, {pipeline_mode = #tpu.pipeline_mode<synchronous>, transform_indices = @transform_2, window_bounds = array<i64: 1, 96>}, {transform_indices = @transform_3, window_bounds = array<i64: 64, 96>}]} {
    %c0 = arith.constant 0 : index
    %c0_0 = arith.constant 0 : index
    %0 = vector.load %arg1[%c0, %c0_0] : memref<64x192xf32, #tpu.memory_space<vmem>>, vector<64x192xf32>
    %c0_1 = arith.constant 0 : index
    %c0_2 = arith.constant 0 : index
    %1 = vector.load %arg2[%c0_1, %c0_2] : memref<192x96xf32, #tpu.memory_space<vmem>>, vector<192x96xf32>
    %cst = arith.constant dense<0.000000e+00> : vector<64x96xf32>
    %2 = tpu.matmul %0, %1, %cst {dimension_numbers = #tpu.dot_dimension_numbers<[1], [0], [0], [1], [0, 0, 1, 1], [], []>} : vector<64x192xf32>, vector<192x96xf32>, vector<64x96xf32> -> vector<64x96xf32>
    %c0_3 = arith.constant 0 : index
    %c0_4 = arith.constant 0 : index
    %3 = vector.load %arg3[%c0_3, %c0_4] : memref<1x96xf32, #tpu.memory_space<vmem>>, vector<1x96xf32>
    %4 = vector.broadcast %3 : vector<1x96xf32> to vector<64x96xf32>
    %5 = arith.addf %2, %4 : vector<64x96xf32>
    %c0_5 = arith.constant 0 : index
    %c0_6 = arith.constant 0 : index
    %6 = vector.load %arg4[%c0_5, %c0_6] : memref<64x96xf32, #tpu.memory_space<vmem>>, vector<64x96xf32>
    tpu.vector_store %arg4[%c0_5, %c0_6], %5 {strides = array<i32>} : memref<64x96xf32, #tpu.memory_space<vmem>>, vector<64x96xf32>,
    return
  }
  func.func @transform_0(%arg0: i32) -> (i32, i32) {
    %c0_i32 = arith.constant 0 : i32
    %c0_i32_0 = arith.constant 0 : i32
    return %arg0, %c0_i32 : i32, i32
  }
  func.func @transform_1(%arg0: i32) -> (i32, i32) {
    %c0_i32 = arith.constant 0 : i32
    %c0_i32_0 = arith.constant 0 : i32
    %c0_i32_1 = arith.constant 0 : i32
    return %c0_i32, %c0_i32_0 : i32, i32
  }
  func.func @transform_2(%arg0: i32) -> (i32, i32) {
    %c0_i32 = arith.constant 0 : i32
    %c0_i32_0 = arith.constant 0 : i32
    %c0_i32_1 = arith.constant 0 : i32
    return %c0_i32, %c0_i32_0 : i32, i32
  }
  func.func @transform_3(%arg0: i32) -> (i32, i32) {
    %c0_i32 = arith.constant 0 : i32
    %c0_i32_0 = arith.constant 0 : i32
    return %arg0, %c0_i32 : i32, i32
  }
}

</mosaic_0001>

<llo_original>
// kernel: tpu_custom_call.1
$region0: #{tpu_custom_call.1}
  #allocation0 [shape = 'u32[]', space=smem, size = 0x4, offset = 0x4, fixed_abs, tag = 'smem constant byte address 0x4 - core index']
  #allocation1 [shape = 'u32[144,128]{1,0:T(1,128)}', space=vmem, size = 0x12000, scoped, tag = 'internal scratch']
  %s0 = inlined_call_operand.vmem [shape: f32[128,192], index: 0, kind: input, shape index: {}]
  %s1 = inlined_call_operand.vmem [shape: f32[192,96], index: 1, kind: input, shape index: {}]
  %s2 = inlined_call_operand.vmem [shape: f32[1,96], index: 2, kind: input, shape index: {}]
  %s3 = inlined_call_operand.vmem [shape: f32[128,96], index: 3, kind: output, shape index: {}]
  %s4 = sld [smem:[#allocation0]]
  $region45: #{tpu_custom_call.1} parent=0
    _
  %s6 = ssub.s32 1, %s4
  %s7 = scalar_select 0, %s6, %s4
  loop: start=0, step=1, limit=4
  $region2: #{tpu_custom_call.1} parent=0 // loop_pre_header
    _
  $region3: #{tpu_custom_call.1} parent=0 // loop_header
    %s9 = sphi 0, %s13
    %p10 = scmp.ge.s32.totalorder %s9, 4
    %s19 = sphi 0, %s21
    %s22 = sphi 0, %s19
    %s23 = sphi 0, %s22
    %s39 = sphi 0, %s23
    %s43 = sphi 0, %s43
    %s45 = sphi 0, %s43
    %s46 = sphi 0, %s45
    %s60 = sphi 0, %s46
    %s64 = sphi 0, %s64
    %s66 = sphi 0, %s64
    %s67 = sphi 0, %s66
    %s81 = sphi 0, %s67
    %s87 = sphi 0, %s89
    %s90 = sphi 0, %s87
    %s91 = sphi 0, %s90
    %s107 = sphi 0, %s91
  $region4: #{tpu_custom_call.1} parent=0 // loop_header_branch
    %12 = sbr.rel (%p10) target = $region8
  $region5: #{tpu_custom_call.1} parent=0 // loop_body
    %s14 = ssub.s32 %s9, 1
    %s15 = ssub.s32 %s9, 2
    %s16 = sadd.s32 %s9, 1
    %s17 = ssub.s32 %s9, %s16
    %p18 = scmp.eq.s32.totalorder %s17, 0
    %s20 = sadd.s32 %s19, 1
    %s21 = scalar_select %p18, %s19, %s20
    %p24 = pneg %p18
    %p25 = scmp.eq.s32.totalorder %s9, 1
    %p26 = por %p24, %p25
    %p27 = scmp.ne.s32.totalorder %s19, %s22
    %p28 = scmp.eq.s32.totalorder %s9, 0
    %p29 = por %p27, %p28
    %p30 = scmp.ne.s32.totalorder %s19, %s22
    %p31 = scmp.eq.s32.totalorder %s14, 1
    %p32 = por %p30, %p31
    %p33 = scmp.ne.s32.totalorder %s22, %s23
    %p34 = scmp.eq.s32.totalorder %s14, 0
    %p35 = por %p33, %p34
    %p36 = scmp.ne.s32.totalorder %s22, %s23
    %p37 = scmp.eq.s32.totalorder %s15, 1
    %p38 = por %p36, %p37
    %p40 = scmp.ne.s32.totalorder %s23, %s39
    %p41 = scmp.eq.s32.totalorder %s15, 0
    %p42 = por %p40, %p41
    %s44 = sadd.s32 %s43, 1
    %p47 = scmp.eq.s32.totalorder %s9, 1
    %p48 = scmp.ne.s32.totalorder %s43, %s45
    %p49 = scmp.eq.s32.totalorder %s9, 0
    %p50 = por %p48, %p49
    %p51 = scmp.ne.s32.totalorder %s43, %s45
    %p52 = scmp.eq.s32.totalorder %s14, 1
    %p53 = por %p51, %p52
    %p54 = scmp.ne.s32.totalorder %s45, %s46
    %p55 = scmp.eq.s32.totalorder %s14, 0
    %p56 = por %p54, %p55
    %p57 = scmp.ne.s32.totalorder %s45, %s46
    %p58 = scmp.eq.s32.totalorder %s15, 1
    %p59 = por %p57, %p58
    %p61 = scmp.ne.s32.totalorder %s46, %s60
    %p62 = scmp.eq.s32.totalorder %s15, 0
    %p63 = por %p61, %p62
    %s65 = sadd.s32 %s64, 1
    %p68 = scmp.eq.s32.totalorder %s9, 1
    %p69 = scmp.ne.s32.totalorder %s64, %s66
    %p70 = scmp.eq.s32.totalorder %s9, 0
    %p71 = por %p69, %p70
    %p72 = scmp.ne.s32.totalorder %s64, %s66
    %p73 = scmp.eq.s32.totalorder %s14, 1
    %p74 = por %p72, %p73
    %p75 = scmp.ne.s32.totalorder %s66, %s67
    %p76 = scmp.eq.s32.totalorder %s14, 0
    %p77 = por %p75, %p76
    %p78 = scmp.ne.s32.totalorder %s66, %s67
    %p79 = scmp.eq.s32.totalorder %s15, 1
    %p80 = por %p78, %p79
    %p82 = scmp.ne.s32.totalorder %s67, %s81
    %p83 = scmp.eq.s32.totalorder %s15, 0
    %p84 = por %p82, %p83
    %s85 = ssub.s32 %s9, %s16
    %p86 = scmp.eq.s32.totalorder %s85, 0
    %s88 = sadd.s32 %s87, 1
    %s89 = scalar_select %p86, %s87, %s88
    %p92 = pneg %p86
    %p93 = scmp.eq.s32.totalorder %s9, 1
    %p94 = por %p92, %p93
    %p95 = scmp.ne.s32.totalorder %s87, %s90
    %p96 = scmp.eq.s32.totalorder %s9, 0
    %p97 = por %p95, %p96
    %p98 = scmp.ne.s32.totalorder %s87, %s90
    %p99 = scmp.eq.s32.totalorder %s14, 1
    %p100 = por %p98, %p99
    %p101 = scmp.ne.s32.totalorder %s90, %s91
    %p102 = scmp.eq.s32.totalorder %s14, 0
    %p103 = por %p101, %p102
    %p104 = scmp.ne.s32.totalorder %s90, %s91
    %p105 = scmp.eq.s32.totalorder %s15, 1
    %p106 = por %p104, %p105
    %p108 = scmp.ne.s32.totalorder %s91, %s107
    %p109 = scmp.eq.s32.totalorder %s15, 0
    %p110 = por %p108, %p109
    %p111 = scmp.le.s32.totalorder 1, %s9
    %p112 = scmp.lt.s32.totalorder %s9, 3
    %p113 = pnand %p111, %p112
    %p114 = pneg %p113
    // Predicated region
    $region9: #{tpu_custom_call.1} parent=5 // pred_check
      _
    $region10: #{tpu_custom_call.1} parent=5 // pred_check_branch
      %116 = sbr.rel (%p113) target = $region12
    $region11: #{tpu_custom_call.1} parent=5 // pred_region
      %s117 = ssub.s32 %s9, 1
      // Predicated region
      $region13: #{tpu_custom_call.1} parent=11 // pred_check
        %p118 = pneg %p56
      $region14: #{tpu_custom_call.1} parent=11 // pred_check_branch
        %120 = sbr.rel (%p118) target = $region16
      $region15: #{tpu_custom_call.1} parent=11 // pred_region
        _
      $region16: #{tpu_custom_call.1} parent=11 // pred_fallthru
        _
      // Predicated region
      $region17: #{tpu_custom_call.1} parent=11 // pred_check
        %p121 = pneg %p77
      $region18: #{tpu_custom_call.1} parent=11 // pred_check_branch
        %123 = sbr.rel (%p121) target = $region20
      $region19: #{tpu_custom_call.1} parent=11 // pred_region
        _
      $region20: #{tpu_custom_call.1} parent=11 // pred_fallthru
        _
    $region12: #{tpu_custom_call.1} parent=5 // pred_fallthru
      _
    %p124 = scmp.lt.s32.totalorder %s9, 2
    // Predicated region
    $region21: #{tpu_custom_call.1} parent=5 // pred_check
      %p125 = pneg %p124
    $region22: #{tpu_custom_call.1} parent=5 // pred_check_branch
      %127 = sbr.rel (%p125) target = $region24
    $region23: #{tpu_custom_call.1} parent=5 // pred_region
      // Predicated region
      $region25: #{tpu_custom_call.1} parent=23 // pred_check
        %p128 = pneg %p29
      $region26: #{tpu_custom_call.1} parent=23 // pred_check_branch
        %130 = sbr.rel (%p128) target = $region28
      $region27: #{tpu_custom_call.1} parent=23 // pred_region
        %s131 = smul.u32 8, %s9
        %p132 = scmp.lt.s32.totalorder %s131, 15
        %s133 = scalar_select %p132, %s131, 15
        %s134 = smul.addr %s133, 2
        %s135 = smul.addr %s134, 8
        %s136 = scalar_lea.vmem %s0, %s135
        %s137 = smul.u32 8, %s9
      $region28: #{tpu_custom_call.1} parent=23 // pred_fallthru
        _
    $region24: #{tpu_custom_call.1} parent=5 // pred_fallthru
      _
    %p138 = scmp.le.s32.totalorder 1, %s9
    %p139 = scmp.lt.s32.totalorder %s9, 3
    %p140 = pnand %p138, %p139
    %p141 = pneg %p140
    // Predicated region
    $region29: #{tpu_custom_call.1} parent=5 // pred_check
      _
    $region30: #{tpu_custom_call.1} parent=5 // pred_check_branch
      %143 = sbr.rel (%p140) target = $region32
    $region31: #{tpu_custom_call.1} parent=5 // pred_region
      %s144 = ssub.s32 %s9, 1
      %s145 = smul.u32 8, %s14
      %p146 = scmp.lt.s32.totalorder %s145, 15
      %s147 = scalar_select %p146, %s145, 15
      %s148 = smul.addr %s147, 2
      %s149 = smul.addr %s148, 8
      %s150 = scalar_lea.vmem %s0, %s149
      %p151 = pneg %p35
      %p152 = pneg %p32
      %p153 = pneg %p56
      %p154 = pneg %p53
      %p155 = pneg %p77
      %p156 = pneg %p74
      %p157 = pneg %p103
      %p158 = pneg %p100
      %s159 = smul.u32 8, %s14
      %p160 = scmp.lt.s32.totalorder %s159, 15
      %s161 = scalar_select %p160, %s159, 15
      %s162 = smul.addr %s161, 8
      %s163 = scalar_lea.vmem %s3, %s162
      %s164 = smul.u32 8, %s14
      %p165 = scmp.lt.s32.totalorder %s164, 15
      %s166 = scalar_select %p165, %s164, 15
      %s167 = smul.addr %s166, 2
      %s168 = smul.addr %s167, 8
      %s169 = scalar_lea.vmem %s0, %s168
      %s170 = smul.u32 8, %s14
      %s171 = smul.u32 8, %s14
      %p172 = scmp.lt.s32.totalorder %s171, 15
      %s173 = scalar_select %p172, %s171, 15
      %s174 = smul.addr %s173, 8
      %s175 = scalar_lea.vmem %s3, %s174
      %s176 = smul.u32 8, %s14
      %v177 = vld [vmem:[%s169] sm:$0xff]
      %v178 = vld [vmem:[%s169 + $0x8] sm:$0xff]
      %v179 = vld [vmem:[%s169 + $0x10] sm:$0xff]
      %v180 = vld [vmem:[%s169 + $0x18] sm:$0xff]
      %v181 = vld [vmem:[%s169 + $0x20] sm:$0xff]
      %v182 = vld [vmem:[%s169 + $0x28] sm:$0xff]
      %v183 = vld [vmem:[%s169 + $0x30] sm:$0xff]
      %v184 = vld [vmem:[%s169 + $0x38] sm:$0xff]
      %v185 = vld [vmem:[%s169 + $0x40] sm:$0xff]
      %v186 = vld [vmem:[%s169 + $0x48] sm:$0xff]
      %v187 = vld [vmem:[%s169 + $0x50] sm:$0xff]
      %v188 = vld [vmem:[%s169 + $0x58] sm:$0xff]
      %v189 = vld [vmem:[%s169 + $0x60] sm:$0xff]
      %v190 = vld [vmem:[%s169 + $0x68] sm:$0xff]
      %v191 = vld [vmem:[%s169 + $0x70] sm:$0xff]
      %v192 = vld [vmem:[%s169 + $0x78] sm:$0xff]
      %v193 = vld [vmem:[%s1] sm:$0xff]
      %v194 = vld [vmem:[%s1 + $0x8] sm:$0xff]
      %v195 = vld [vmem:[%s1 + $0x10] sm:$0xff]
      %v196 = vld [vmem:[%s1 + $0x18] sm:$0xff]
      %v197 = vld [vmem:[%s1 + $0x20] sm:$0xff]
      %v198 = vld [vmem:[%s1 + $0x28] sm:$0xff]
      %v199 = vld [vmem:[%s1 + $0x30] sm:$0xff]
      %v200 = vld [vmem:[%s1 + $0x38] sm:$0xff]
      %v201 = vld [vmem:[%s1 + $0x40] sm:$0xff]
      %v202 = vld [vmem:[%s1 + $0x48] sm:$0xff]
      %v203 = vld [vmem:[%s1 + $0x50] sm:$0xff]
      %v204 = vld [vmem:[%s1 + $0x58] sm:$0xff]
      %v205 = vld [vmem:[%s1 + $0x60] sm:$0xff]
      %v206 = vld [vmem:[%s1 + $0x68] sm:$0xff]
      %v207 = vld [vmem:[%s1 + $0x70] sm:$0xff]
      %v208 = vld [vmem:[%s1 + $0x78] sm:$0xff]
      %v209 = vld [vmem:[%s1 + $0x80] sm:$0xff]
      %v210 = vld [vmem:[%s1 + $0x88] sm:$0xff]
      %v211 = vld [vmem:[%s1 + $0x90] sm:$0xff]
      %v212 = vld [vmem:[%s1 + $0x98] sm:$0xff]
      %v213 = vld [vmem:[%s1 + $0xa0] sm:$0xff]
      %v214 = vld [vmem:[%s1 + $0xa8] sm:$0xff]
      %v215 = vld [vmem:[%s1 + $0xb0] sm:$0xff]
      %v216 = vld [vmem:[%s1 + $0xb8] sm:$0xff]
      %v217 = vld [vmem:[%s2] sm:$0x1]
      %v219 = vlaneseq
      %v220 = vshrl.u32 %v219, 7
      %v221 = vsub.s32 0, %v220
      %v222 = vrot.slane %v217, %v221
      %vm224 = vcmask 523264
      %v226 = vsel %vm224, %v178, 0
      %v229 = vsel %vm224, %v180, 0
      %v232 = vsel %vm224, %v182, 0
      %v235 = vsel %vm224, %v184, 0
      %v238 = vsel %vm224, %v186, 0
      %v241 = vsel %vm224, %v188, 0
      %v244 = vsel %vm224, %v190, 0
      %v247 = vsel %vm224, %v192, 0
      %249 = vmatprep.subr.mxu0 0.0
      %250 = vmatpush1.msra.mxu0 %v208
      %251 = vmatprep.subr.mxu0 0.0
      %252 = vmatpush1.msra.mxu0 %v207
      %253 = vmatprep.subr.mxu0 0.0
      %254 = vmatpush1.msra.mxu0 %v206
      %255 = vmatprep.subr.mxu0 0.0
      %256 = vmatpush1.msra.mxu0 %v205
      %257 = vmatprep.subr.mxu0 0.0
      %258 = vmatpush1.msra.mxu0 %v204
      %259 = vmatprep.subr.mxu0 0.0
      %260 = vmatpush1.msra.mxu0 %v203
      %261 = vmatprep.subr.mxu0 0.0
      %262 = vmatpush1.msra.mxu0 %v202
      %263 = vmatprep.subr.mxu0 0.0
      %264 = vmatpush1.msra.mxu0 %v201
      %265 = vmatprep.subr.mxu0 0.0
      %266 = vmatpush1.msra.mxu0 %v200
      %267 = vmatprep.subr.mxu0 0.0
      %268 = vmatpush1.msra.mxu0 %v199
      %269 = vmatprep.subr.mxu0 0.0
      %270 = vmatpush1.msra.mxu0 %v198
      %271 = vmatprep.subr.mxu0 0.0
      %272 = vmatpush1.msra.mxu0 %v197
      %273 = vmatprep.subr.mxu0 0.0
      %274 = vmatpush1.msra.mxu0 %v196
      %275 = vmatprep.subr.mxu0 0.0
      %276 = vmatpush1.msra.mxu0 %v195
      %277 = vmatprep.subr.mxu0 0.0
      %278 = vmatpush1.msra.mxu0 %v194
      %279 = vmatprep.subr.mxu0 0.0
      %280 = vmatpush1.msra.mxu0 %v193
      %281 = vmatprep.subr.mxu0 0.0
      %282 = vmatpush2.msra.mxu0 0.0
      %283 = vmatprep.subr.mxu0 0.0
      %284 = vmatpush2.msra.mxu0 0.0
      %285 = vmatprep.subr.mxu0 0.0
      %286 = vmatpush2.msra.mxu0 0.0
      %287 = vmatprep.subr.mxu0 0.0
      %288 = vmatpush2.msra.mxu0 0.0
      %289 = vmatprep.subr.mxu0 0.0
      %290 = vmatpush2.msra.mxu0 0.0
      %291 = vmatprep.subr.mxu0 0.0
      %292 = vmatpush2.msra.mxu0 0.0
      %293 = vmatprep.subr.mxu0 0.0
      %294 = vmatpush2.msra.mxu0 0.0
      %295 = vmatprep.subr.mxu0 0.0
      %296 = vmatpush2.msra.mxu0 0.0
      %297 = vmatprep.subr.mxu0 0.0
      %298 = vmatpush2.msra.mxu0 %v216
      %299 = vmatprep.subr.mxu0 0.0
      %300 = vmatpush2.msra.mxu0 %v215
      %301 = vmatprep.subr.mxu0 0.0
      %302 = vmatpush2.msra.mxu0 %v214
      %303 = vmatprep.subr.mxu0 0.0
      %304 = vmatpush2.msra.mxu0 %v213
      %305 = vmatprep.subr.mxu0 0.0
      %306 = vmatpush2.msra.mxu0 %v212
      %307 = vmatprep.subr.mxu0 0.0
      %308 = vmatpush2.msra.mxu0 %v211
      %309 = vmatprep.subr.mxu0 0.0
      %310 = vmatpush2.msra.mxu0 %v210
      %311 = vmatprep.subr.mxu0 0.0
      %312 = vmatpush2.msra.mxu0 %v209
      %313 = vmatprep.mubr.f32.mxu0 %v226
      %314 = vmatmul.mubr.f32.gmra.mxu0 %v177
      %v315 = vpop.f32.mrf.mxu0
      %v316 = vadd.f32 %v222, %v315
      %v317 = vpop.f32.mrf.mxu0
      %318 = vmatprep.mubr.f32.mxu0 %v229
      %319 = vmatmul.mubr.f32.gmra.mxu0 %v179
      %v320 = vpop.f32.mrf.mxu0
      %v321 = vadd.f32 %v222, %v320
      %v322 = vpop.f32.mrf.mxu0
      %323 = vmatprep.mubr.f32.mxu0 %v232
      %324 = vmatmul.mubr.f32.gmra.mxu0 %v181
      %v325 = vpop.f32.mrf.mxu0
      %v326 = vadd.f32 %v222, %v325
      %v327 = vpop.f32.mrf.mxu0
      %328 = vmatprep.mubr.f32.mxu0 %v235
      %329 = vmatmul.mubr.f32.gmra.mxu0 %v183
      %v330 = vpop.f32.mrf.mxu0
      %v331 = vadd.f32 %v222, %v330
      %v332 = vpop.f32.mrf.mxu0
      %333 = vmatprep.mubr.f32.mxu0 %v238
      %334 = vmatmul.mubr.f32.gmra.mxu0 %v185
      %v335 = vpop.f32.mrf.mxu0
      %v336 = vadd.f32 %v222, %v335
      %v337 = vpop.f32.mrf.mxu0
      %338 = vmatprep.mubr.f32.mxu0 %v241
      %339 = vmatmul.mubr.f32.gmra.mxu0 %v187
      %v340 = vpop.f32.mrf.mxu0
      %v341 = vadd.f32 %v222, %v340
      %v342 = vpop.f32.mrf.mxu0
      %343 = vmatprep.mubr.f32.mxu0 %v244
      %344 = vmatmul.mubr.f32.gmra.mxu0 %v189
      %v345 = vpop.f32.mrf.mxu0
      %v346 = vadd.f32 %v222, %v345
      %v347 = vpop.f32.mrf.mxu0
      %348 = vmatprep.mubr.f32.mxu0 %v247
      %349 = vmatmul.mubr.f32.gmra.mxu0 %v191
      %v350 = vpop.f32.mrf.mxu0
      %v351 = vadd.f32 %v222, %v350
      %v352 = vpop.f32.mrf.mxu0
      %353 = vdwg.mxu0
      %vm354 = vcmask 785408
      %355 = vst.msk [vmem:[%s175] sm:$0xff] %vm354, %v316
      %356 = vst.msk [vmem:[%s175 + $0x8] sm:$0xff] %vm354, %v321
      %357 = vst.msk [vmem:[%s175 + $0x10] sm:$0xff] %vm354, %v326
      %358 = vst.msk [vmem:[%s175 + $0x18] sm:$0xff] %vm354, %v331
      %359 = vst.msk [vmem:[%s175 + $0x20] sm:$0xff] %vm354, %v336
      %360 = vst.msk [vmem:[%s175 + $0x28] sm:$0xff] %vm354, %v341
      %361 = vst.msk [vmem:[%s175 + $0x30] sm:$0xff] %vm354, %v346
      %362 = vst.msk [vmem:[%s175 + $0x38] sm:$0xff] %vm354, %v351
      %s363 = smul.u32 8, %s14
      %p364 = scmp.lt.s32.totalorder %s363, 15
      %s365 = scalar_select %p364, %s363, 15
      %s366 = smul.addr %s365, 8
      %s367 = scalar_lea.vmem %s3, %s366
      // Predicated region
      $region33: #{tpu_custom_call.1} parent=31 // pred_check
        %p368 = pneg %p100
      $region34: #{tpu_custom_call.1} parent=31 // pred_check_branch
        %370 = sbr.rel (%p368) target = $region36
      $region35: #{tpu_custom_call.1} parent=31 // pred_region
        %s371 = smul.u32 8, %s14
      $region36: #{tpu_custom_call.1} parent=31 // pred_fallthru
        _
    $region32: #{tpu_custom_call.1} parent=5 // pred_fallthru
      _
    %p372 = scmp.le.s32.totalorder 2, %s9
    // Predicated region
    $region37: #{tpu_custom_call.1} parent=5 // pred_check
      %p373 = pneg %p372
    $region38: #{tpu_custom_call.1} parent=5 // pred_check_branch
      %375 = sbr.rel (%p373) target = $region40
    $region39: #{tpu_custom_call.1} parent=5 // pred_region
      %s376 = ssub.s32 %s9, 2
      // Predicated region
      $region41: #{tpu_custom_call.1} parent=39 // pred_check
        %p377 = pneg %p106
      $region42: #{tpu_custom_call.1} parent=39 // pred_check_branch
        %379 = sbr.rel (%p377) target = $region44
      $region43: #{tpu_custom_call.1} parent=39 // pred_region
        %s380 = smul.u32 8, %s15
        %p381 = scmp.lt.s32.totalorder %s380, 15
        %s382 = scalar_select %p381, %s380, 15
        %s383 = smul.addr %s382, 8
        %s384 = scalar_lea.vmem %s3, %s383
      $region44: #{tpu_custom_call.1} parent=39 // pred_fallthru
        _
    $region40: #{tpu_custom_call.1} parent=5 // pred_fallthru
      _
  $region6: #{tpu_custom_call.1} parent=0 // loop_footer
    %s13 = sadd.s32 1, %s9
  $region7: #{tpu_custom_call.1} parent=0 // loop_footer_branch
    %8 = sbr.rel target = $region3
  $region8: #{tpu_custom_call.1} parent=0 // loop_exit
    _

</llo_original>
